<compile_context>
chip_gen: v7x
topology: tpu7x:2x2x1
jax: 0.10.0
libtpu: 0.0.40
codegen_flags: <defaults>
</compile_context>

<pallas_src>
import jax
import jax.numpy as jnp
from jax.experimental import pallas as pl
from jax.experimental.pallas import tpu as pltpu

EMBED_DIM = 32
HIDDEN_DIM = 32
VOCAB_SIZE = 128


def _nextword_kernel(words_ref,      # SMEM (T,)   int32  -- scalar prefetch (token ids)
                     emb_ref,        # VMEM (V, E)        -- resident embedding table
                     wih_ref,        # VMEM (E, 4H)       -- W_ih^T
                     whh_ref,        # VMEM (H, 4H)       -- W_hh^T
                     bg_ref,         # VMEM (1, 4H)       -- b_ih + b_hh
                     wout_ref,       # VMEM (H, V)        -- W_out^T
                     bout_ref,       # VMEM (1, V)        -- b_out
                     state_in_ref,   # VMEM (2, H)        -- [h0 ; c0]
                     scores_ref,     # VMEM (T, V)        -- all per-step scores
                     state_out_ref,  # VMEM (2, H)        -- [hT ; cT]
                     xbuf,           # VMEM scratch (T, E) -- gathered embeddings
                     hbuf):          # VMEM scratch (T, H) -- per-step hidden states
    T = scores_ref.shape[0]
    H = state_in_ref.shape[-1]

    # 1) Gather the T embedding rows from the resident table (dynamic sublane slice,
    #    driven by the SMEM-prefetched token ids).  T is static -> fully unrolled.
    for t in range(T):
        xbuf[t:t + 1, :] = emb_ref[pl.ds(words_ref[t], 1), :]

    # 2) Batched non-recurrent input projection for all steps at once:
    #    (T, E) @ (E, 4H) + (b_ih + b_hh)  -> (T, 4H), PyTorch gate order i,f,g,o.
    xproj = (jnp.dot(xbuf[...], wih_ref[...], preferred_element_type=jnp.float32)
             + bg_ref[...])

    # 3) Serial recurrence: only h @ W_hh^T and the gate elementwise work remain
    #    on the per-step critical path.
    h = state_in_ref[0:1, :]                        # (1, H)
    c = state_in_ref[1:2, :]                        # (1, H)
    for t in range(T):
        gates = xproj[t:t + 1, :] + jnp.dot(h, whh_ref[...],
                                            preferred_element_type=jnp.float32)  # (1, 4H)
        sig = jax.nn.sigmoid(gates)                 # one full-vreg EUP pass
        tnh = jnp.tanh(gates)                       # one full-vreg EUP pass
        i_g = sig[:, 0 * H:1 * H]
        f_g = sig[:, 1 * H:2 * H]
        g_g = tnh[:, 2 * H:3 * H]
        o_g = sig[:, 3 * H:4 * H]
        c = f_g * c + i_g * g_g
        h = o_g * jnp.tanh(c)
        hbuf[t:t + 1, :] = h

    # 4) One deferred, batched output projection + sigmoid + one lane-dense store.
    logits = (jnp.dot(hbuf[...], wout_ref[...], preferred_element_type=jnp.float32)
              + bout_ref[...])                      # (T, V)
    scores_ref[...] = jax.nn.sigmoid(logits)

    state_out_ref[0:1, :] = h
    state_out_ref[1:2, :] = c


@jax.jit
def nextword_sequence(words, params, state):
    """Run T LSTM steps in ONE pallas_call (single grid step, in-kernel loop).

    words: int32 [T]; state: (h, c) each (1, 1, H).
    Returns (scores [T, V], (h', c') each (1, 1, H))."""
    emb, wih_t, whh_t, bg, wout_t, bout = params
    h, c = state
    V, E = emb.shape
    H = h.shape[-1]
    T = words.shape[0]

    state2 = jnp.concatenate(
        [h.reshape(1, H), c.reshape(1, H)], axis=0).astype(jnp.float32)   # (2, H)
    # NOTE: clip silently remaps out-of-range ids (PyTorch would raise); OOB-safe gather.
    words_i32 = jnp.clip(words.astype(jnp.int32), 0, V - 1)

    const = lambda i, w: (0, 0)

    scores, state_out = pl.pallas_call(
        _nextword_kernel,
        out_shape=(
            jax.ShapeDtypeStruct((T, V), jnp.float32),
            jax.ShapeDtypeStruct((2, H), jnp.float32),
        ),
        grid_spec=pltpu.PrefetchScalarGridSpec(
            num_scalar_prefetch=1,
            grid=(1,),
            in_specs=[
                pl.BlockSpec((V, E), const),          # embedding table (resident)
                pl.BlockSpec((E, 4 * H), const),      # W_ih^T
                pl.BlockSpec((H, 4 * H), const),      # W_hh^T
                pl.BlockSpec((1, 4 * H), const),      # b_ih + b_hh
                pl.BlockSpec((H, V), const),          # W_out^T
                pl.BlockSpec((1, V), const),          # b_out
                pl.BlockSpec((2, H), const),          # initial [h; c]
            ],
            out_specs=[
                pl.BlockSpec((T, V), const),          # all scores (lane-dense store)
                pl.BlockSpec((2, H), const),          # final [h; c]
            ],
            scratch_shapes=[
                pltpu.VMEM((T, E), jnp.float32),      # gathered embeddings
                pltpu.VMEM((T, H), jnp.float32),      # per-step hidden states
            ],
        ),
        compiler_params=pltpu.CompilerParams(
            dimension_semantics=("arbitrary",)),
    )(words_i32, emb, wih_t, whh_t, bg, wout_t, bout, state2)

    h_new = state_out[0:1, :].reshape(1, 1, H)
    c_new = state_out[1:2, :].reshape(1, 1, H)
    return scores, (h_new, c_new)


def nextword_forward(word, params, state):
    """Torch-style single-step forward: word int32 [1] -> (scores [1, V], (h', c'))."""
    scores, new_state = nextword_sequence(word, params, state)
    return scores, new_state


def init_params(key, embedding_dim, hidden_dim, vocab_size):
    """Deterministic synthetic params, pre-laid-out for the kernel:
       wih_t (E, 4H), whh_t (H, 4H) kept separate (input projection is hoisted),
       bg = b_ih + b_hh (1, 4H) fused."""
    ks = jax.random.split(key, 7)
    scale = 0.1
    emb = scale * jax.random.normal(ks[0], (vocab_size, embedding_dim), jnp.float32)
    wih_t = scale * jax.random.normal(ks[1], (embedding_dim, 4 * hidden_dim), jnp.float32)
    whh_t = scale * jax.random.normal(ks[2], (hidden_dim, 4 * hidden_dim), jnp.float32)
    bih = scale * jax.random.normal(ks[3], (1, 4 * hidden_dim), jnp.float32)
    bhh = scale * jax.random.normal(ks[4], (1, 4 * hidden_dim), jnp.float32)
    wout_t = scale * jax.random.normal(ks[5], (hidden_dim, vocab_size), jnp.float32)
    bout = scale * jax.random.normal(ks[6], (1, vocab_size), jnp.float32)
    bg = bih + bhh                                   # (1, 4H)
    return (emb, wih_t, whh_t, bg, wout_t, bout)


def reference_step(word, params, state):
    """Pure-JAX single-step reference mirroring torch semantics (same params)."""
    emb, wih_t, whh_t, bg, wout_t, bout = params
    h, c = state
    H = h.shape[-1]
    x = emb[word][None, :]                                    # (1, E)
    h2, c2 = h.reshape(1, H), c.reshape(1, H)
    gates = x @ wih_t + h2 @ whh_t + bg
    i_g = jax.nn.sigmoid(gates[:, 0 * H:1 * H])
    f_g = jax.nn.sigmoid(gates[:, 1 * H:2 * H])
    g_g = jnp.tanh(gates[:, 2 * H:3 * H])
    o_g = jax.nn.sigmoid(gates[:, 3 * H:4 * H])
    c_new = f_g * c2 + i_g * g_g
    h_new = o_g * jnp.tanh(c_new)
    scores = jax.nn.sigmoid(h_new @ wout_t + bout)
    return scores, (h_new.reshape(1, 1, H), c_new.reshape(1, 1, H))


def reference_sequence(words, params, state):
    scores = []
    for t in range(words.shape[0]):
        s, state = reference_step(words[t], params, state)
        scores.append(s)
    return jnp.concatenate(scores, axis=0), state


if __name__ == "__main__":
    key = jax.random.PRNGKey(0)
    k_word, k_seq, k_params, k_state = jax.random.split(key, 4)

    params = init_params(k_params, EMBED_DIM, HIDDEN_DIM, VOCAB_SIZE)

    # Initial LSTM state (h, c), each (1, 1, H) as in PyTorch.
    kh, kc = jax.random.split(k_state)
    h0 = 0.1 * jax.random.normal(kh, (1, 1, HIDDEN_DIM), jnp.float32)
    c0 = 0.1 * jax.random.normal(kc, (1, 1, HIDDEN_DIM), jnp.float32)

    # --- Single-step forward (exact torch `forward(word, state)` semantics) ---
    word = jax.random.randint(k_word, (1,), 0, VOCAB_SIZE, dtype=jnp.int32)
    scores, (h1, c1) = nextword_forward(word, params, (h0, c0))
    jax.block_until_ready((scores, h1, c1))

    scores_ref, (h1_ref, c1_ref) = reference_step(word[0], params, (h0, c0))
    assert scores.shape == (1, VOCAB_SIZE)
    assert h1.shape == (1, 1, HIDDEN_DIM) and c1.shape == (1, 1, HIDDEN_DIM)
    assert jnp.allclose(scores, scores_ref, atol=1e-5, rtol=1e-5)
    assert jnp.allclose(h1, h1_ref, atol=1e-5, rtol=1e-5)
    assert jnp.allclose(c1, c1_ref, atol=1e-5, rtol=1e-5)

    # --- Multi-step decode: T tokens, one pallas_call, one grid step ---
    T = 8
    words = jax.random.randint(k_seq, (T,), 0, VOCAB_SIZE, dtype=jnp.int32)
    seq_scores, (hT, cT) = nextword_sequence(words, params, (h0, c0))
    jax.block_until_ready((seq_scores, hT, cT))

    seq_ref, (hT_ref, cT_ref) = reference_sequence(words, params, (h0, c0))
    assert seq_scores.shape == (T, VOCAB_SIZE)
    assert jnp.allclose(seq_scores, seq_ref, atol=1e-5, rtol=1e-5)
    assert jnp.allclose(hT, hT_ref, atol=1e-5, rtol=1e-5)
    assert jnp.allclose(cT, cT_ref, atol=1e-5, rtol=1e-5)

    print("KERNEL_OK")
</pallas_src>

<mosaic_0001>
module attributes {stable_mosaic.version = 11 : i64} {
  func.func @_nextword_kernel(%arg0: i32, %arg1: memref<1xi32, #tpu.memory_space<smem>>, %arg2: memref<128x32xf32, #tpu.memory_space<vmem>>, %arg3: memref<32x128xf32, #tpu.memory_space<vmem>>, %arg4: memref<32x128xf32, #tpu.memory_space<vmem>>, %arg5: memref<1x128xf32, #tpu.memory_space<vmem>>, %arg6: memref<32x128xf32, #tpu.memory_space<vmem>>, %arg7: memref<1x128xf32, #tpu.memory_space<vmem>>, %arg8: memref<2x32xf32, #tpu.memory_space<vmem>>, %arg9: memref<1x128xf32, #tpu.memory_space<vmem>>, %arg10: memref<2x32xf32, #tpu.memory_space<vmem>>, %arg11: memref<1x32xf32, #tpu.memory_space<vmem>>, %arg12: memref<1x32xf32, #tpu.memory_space<vmem>>) attributes {dimension_semantics = [#tpu.dimension_semantics<arbitrary>], iteration_bounds = array<i64: 1>, scalar_prefetch = 1 : i64, scratch_operands = 2 : i64, tpu.core_type = #tpu.core_type<tc>, window_params = [{pipeline_mode = #tpu.pipeline_mode<synchronous>, transform_indices = @transform_0, window_bounds = array<i64: 128, 32>}, {pipeline_mode = #tpu.pipeline_mode<synchronous>, transform_indices = @transform_1, window_bounds = array<i64: 32, 128>}, {pipeline_mode = #tpu.pipeline_mode<synchronous>, transform_indices = @transform_2, window_bounds = array<i64: 32, 128>}, {pipeline_mode = #tpu.pipeline_mode<synchronous>, transform_indices = @transform_3, window_bounds = array<i64: 1, 128>}, {pipeline_mode = #tpu.pipeline_mode<synchronous>, transform_indices = @transform_4, window_bounds = array<i64: 32, 128>}, {pipeline_mode = #tpu.pipeline_mode<synchronous>, transform_indices = @transform_5, window_bounds = array<i64: 1, 128>}, {pipeline_mode = #tpu.pipeline_mode<synchronous>, transform_indices = @transform_6, window_bounds = array<i64: 2, 32>}, {pipeline_mode = #tpu.pipeline_mode<synchronous>, transform_indices = @transform_7, window_bounds = array<i64: 1, 128>}, {pipeline_mode = #tpu.pipeline_mode<synchronous>, transform_indices = @transform_8, window_bounds = array<i64: 2, 32>}]} {
    %c0 = arith.constant 0 : index
    %0 = memref.load %arg1[%c0] : memref<1xi32, #tpu.memory_space<smem>>
    %1 = arith.index_cast %0 : i32 to index
    %c0_0 = arith.constant 0 : index
    %2 = vector.load %arg2[%1, %c0_0] : memref<128x32xf32, #tpu.memory_space<vmem>>, vector<1x32xf32>
    %c0_1 = arith.constant 0 : index
    %c0_2 = arith.constant 0 : index
    %3 = vector.load %arg11[%c0_1, %c0_2] : memref<1x32xf32, #tpu.memory_space<vmem>>, vector<1x32xf32>
    tpu.vector_store %arg11[%c0_1, %c0_2], %2 {strides = array<i32>} : memref<1x32xf32, #tpu.memory_space<vmem>>, vector<1x32xf32>,
    %c0_3 = arith.constant 0 : index
    %c0_4 = arith.constant 0 : index
    %4 = vector.load %arg11[%c0_3, %c0_4] : memref<1x32xf32, #tpu.memory_space<vmem>>, vector<1x32xf32>
    %c0_5 = arith.constant 0 : index
    %c0_6 = arith.constant 0 : index
    %5 = vector.load %arg3[%c0_5, %c0_6] : memref<32x128xf32, #tpu.memory_space<vmem>>, vector<32x128xf32>
    %cst = arith.constant dense<0.000000e+00> : vector<1x128xf32>
    %6 = tpu.matmul %4, %5, %cst {dimension_numbers = #tpu.dot_dimension_numbers<[1], [0], [0], [1], [0, 0, 1, 1], [], []>} : vector<1x32xf32>, vector<32x128xf32>, vector<1x128xf32> -> vector<1x128xf32>
    %c0_7 = arith.constant 0 : index
    %c0_8 = arith.constant 0 : index
    %7 = vector.load %arg5[%c0_7, %c0_8] : memref<1x128xf32, #tpu.memory_space<vmem>>, vector<1x128xf32>
    %8 = arith.addf %6, %7 : vector<1x128xf32>
    %c0_9 = arith.constant 0 : index
    %c0_10 = arith.constant 0 : index
    %9 = vector.load %arg8[%c0_9, %c0_10] : memref<2x32xf32, #tpu.memory_space<vmem>>, vector<1x32xf32>
    %c1 = arith.constant 1 : index
    %c0_11 = arith.constant 0 : index
    %10 = vector.load %arg8[%c1, %c0_11] : memref<2x32xf32, #tpu.memory_space<vmem>>, vector<1x32xf32>
    %c0_12 = arith.constant 0 : index
    %c0_13 = arith.constant 0 : index
    %11 = vector.load %arg4[%c0_12, %c0_13] : memref<32x128xf32, #tpu.memory_space<vmem>>, vector<32x128xf32>
    %cst_14 = arith.constant dense<0.000000e+00> : vector<1x128xf32>
    %12 = tpu.matmul %9, %11, %cst_14 {dimension_numbers = #tpu.dot_dimension_numbers<[1], [0], [0], [1], [0, 0, 1, 1], [], []>} : vector<1x32xf32>, vector<32x128xf32>, vector<1x128xf32> -> vector<1x128xf32>
    %13 = arith.addf %8, %12 : vector<1x128xf32>
    %14 = arith.negf %13 : vector<1x128xf32>
    %15 = math.exp %14 : vector<1x128xf32>
    %cst_15 = arith.constant 1.000000e+00 : f32
    %16 = vector.broadcast %cst_15 : f32 to vector<1x128xf32>
    %17 = arith.addf %16, %15 : vector<1x128xf32>
    %18 = arith.divf %16, %17 : vector<1x128xf32>
    %19 = math.tanh %13 : vector<1x128xf32>
    %20 = vector.extract_strided_slice %18 {offsets = [0, 0], sizes = [1, 32], strides = [1, 1]} : vector<1x128xf32> to vector<1x32xf32>
    %21 = vector.extract_strided_slice %18 {offsets = [0, 32], sizes = [1, 32], strides = [1, 1]} : vector<1x128xf32> to vector<1x32xf32>
    %22 = vector.extract_strided_slice %19 {offsets = [0, 64], sizes = [1, 32], strides = [1, 1]} : vector<1x128xf32> to vector<1x32xf32>
    %23 = vector.extract_strided_slice %18 {offsets = [0, 96], sizes = [1, 32], strides = [1, 1]} : vector<1x128xf32> to vector<1x32xf32>
    %24 = arith.mulf %21, %10 : vector<1x32xf32>
    %25 = arith.mulf %20, %22 : vector<1x32xf32>
    %26 = arith.addf %24, %25 : vector<1x32xf32>
    %27 = math.tanh %26 : vector<1x32xf32>
    %28 = arith.mulf %23, %27 : vector<1x32xf32>
    %c0_16 = arith.constant 0 : index
    %c0_17 = arith.constant 0 : index
    %29 = vector.load %arg12[%c0_16, %c0_17] : memref<1x32xf32, #tpu.memory_space<vmem>>, vector<1x32xf32>
    tpu.vector_store %arg12[%c0_16, %c0_17], %28 {strides = array<i32>} : memref<1x32xf32, #tpu.memory_space<vmem>>, vector<1x32xf32>,
    %c0_18 = arith.constant 0 : index
    %c0_19 = arith.constant 0 : index
    %30 = vector.load %arg12[%c0_18, %c0_19] : memref<1x32xf32, #tpu.memory_space<vmem>>, vector<1x32xf32>
    %c0_20 = arith.constant 0 : index
    %c0_21 = arith.constant 0 : index
    %31 = vector.load %arg6[%c0_20, %c0_21] : memref<32x128xf32, #tpu.memory_space<vmem>>, vector<32x128xf32>
    %cst_22 = arith.constant dense<0.000000e+00> : vector<1x128xf32>
    %32 = tpu.matmul %30, %31, %cst_22 {dimension_numbers = #tpu.dot_dimension_numbers<[1], [0], [0], [1], [0, 0, 1, 1], [], []>} : vector<1x32xf32>, vector<32x128xf32>, vector<1x128xf32> -> vector<1x128xf32>
    %c0_23 = arith.constant 0 : index
    %c0_24 = arith.constant 0 : index
    %33 = vector.load %arg7[%c0_23, %c0_24] : memref<1x128xf32, #tpu.memory_space<vmem>>, vector<1x128xf32>
    %34 = arith.addf %32, %33 : vector<1x128xf32>
    %35 = arith.negf %34 : vector<1x128xf32>
    %36 = math.exp %35 : vector<1x128xf32>
    %cst_25 = arith.constant 1.000000e+00 : f32
    %37 = vector.broadcast %cst_25 : f32 to vector<1x128xf32>
    %38 = arith.addf %37, %36 : vector<1x128xf32>
    %39 = arith.divf %37, %38 : vector<1x128xf32>
    %c0_26 = arith.constant 0 : index
    %c0_27 = arith.constant 0 : index
    %40 = vector.load %arg9[%c0_26, %c0_27] : memref<1x128xf32, #tpu.memory_space<vmem>>, vector<1x128xf32>
    tpu.vector_store %arg9[%c0_26, %c0_27], %39 {strides = array<i32>} : memref<1x128xf32, #tpu.memory_space<vmem>>, vector<1x128xf32>,
    %c0_28 = arith.constant 0 : index
    %c0_29 = arith.constant 0 : index
    %41 = vector.load %arg10[%c0_28, %c0_29] : memref<2x32xf32, #tpu.memory_space<vmem>>, vector<1x32xf32>
    tpu.vector_store %arg10[%c0_28, %c0_29], %28 {strides = array<i32>} : memref<2x32xf32, #tpu.memory_space<vmem>>, vector<1x32xf32>,
    %c1_30 = arith.constant 1 : index
    %c0_31 = arith.constant 0 : index
    %42 = vector.load %arg10[%c1_30, %c0_31] : memref<2x32xf32, #tpu.memory_space<vmem>>, vector<1x32xf32>
    tpu.vector_store %arg10[%c1_30, %c0_31], %26 {strides = array<i32>} : memref<2x32xf32, #tpu.memory_space<vmem>>, vector<1x32xf32>,
    return
  }
  func.func @transform_0(%arg0: i32, %arg1: memref<1xi32, #tpu.memory_space<smem>>) -> (i32, i32) {
    %c0_i32 = arith.constant 0 : i32
    %c0_i32_0 = arith.constant 0 : i32
    %c0_i32_1 = arith.constant 0 : i32
    return %c0_i32, %c0_i32_0 : i32, i32
  }
  func.func @transform_1(%arg0: i32, %arg1: memref<1xi32, #tpu.memory_space<smem>>) -> (i32, i32) {
    %c0_i32 = arith.constant 0 : i32
    %c0_i32_0 = arith.constant 0 : i32
    %c0_i32_1 = arith.constant 0 : i32
    return %c0_i32, %c0_i32_0 : i32, i32
  }
  func.func @transform_2(%arg0: i32, %arg1: memref<1xi32, #tpu.memory_space<smem>>) -> (i32, i32) {
    %c0_i32 = arith.constant 0 : i32
    %c0_i32_0 = arith.constant 0 : i32
    %c0_i32_1 = arith.constant 0 : i32
    return %c0_i32, %c0_i32_0 : i32, i32
  }
  func.func @transform_3(%arg0: i32, %arg1: memref<1xi32, #tpu.memory_space<smem>>) -> (i32, i32) {
    %c0_i32 = arith.constant 0 : i32
    %c0_i32_0 = arith.constant 0 : i32
    %c0_i32_1 = arith.constant 0 : i32
    return %c0_i32, %c0_i32_0 : i32, i32
  }
  func.func @transform_4(%arg0: i32, %arg1: memref<1xi32, #tpu.memory_space<smem>>) -> (i32, i32) {
    %c0_i32 = arith.constant 0 : i32
    %c0_i32_0 = arith.constant 0 : i32
    %c0_i32_1 = arith.constant 0 : i32
    return %c0_i32, %c0_i32_0 : i32, i32
  }
  func.func @transform_5(%arg0: i32, %arg1: memref<1xi32, #tpu.memory_space<smem>>) -> (i32, i32) {
    %c0_i32 = arith.constant 0 : i32
    %c0_i32_0 = arith.constant 0 : i32
    %c0_i32_1 = arith.constant 0 : i32
    return %c0_i32, %c0_i32_0 : i32, i32
  }
  func.func @transform_6(%arg0: i32, %arg1: memref<1xi32, #tpu.memory_space<smem>>) -> (i32, i32) {
    %c0_i32 = arith.constant 0 : i32
    %c0_i32_0 = arith.constant 0 : i32
    %c0_i32_1 = arith.constant 0 : i32
    return %c0_i32, %c0_i32_0 : i32, i32
  }
  func.func @transform_7(%arg0: i32, %arg1: memref<1xi32, #tpu.memory_space<smem>>) -> (i32, i32) {
    %c0_i32 = arith.constant 0 : i32
    %c0_i32_0 = arith.constant 0 : i32
    %c0_i32_1 = arith.constant 0 : i32
    return %c0_i32, %c0_i32_0 : i32, i32
  }
  func.func @transform_8(%arg0: i32, %arg1: memref<1xi32, #tpu.memory_space<smem>>) -> (i32, i32) {
    %c0_i32 = arith.constant 0 : i32
    %c0_i32_0 = arith.constant 0 : i32
    %c0_i32_1 = arith.constant 0 : i32
    return %c0_i32, %c0_i32_0 : i32, i32
  }
}

</mosaic_0001>

<llo_original>
// kernel: nextword_sequence.1
$region0: #{nextword_sequence.1}
  #allocation0 [shape = 'u32[]', space=smem, size = 0x4, offset = 0x4, fixed_abs, tag = 'smem constant byte address 0x4 - core index']
  #allocation1 [shape = 'u32[144,128]{1,0:T(1,128)}', space=vmem, size = 0x12000, scoped, tag = 'internal scratch']
  #allocation2 [shape = 'f32[1,32]{1,0:T(1,128)}', space=vmem, size = 0x200, scoped, tag = 'scratch operand']
  #allocation3 [shape = 'f32[1,32]{1,0:T(1,128)}', space=vmem, size = 0x200, scoped, tag = 'scratch operand']
  #allocation4 [shape = 's32[1]{0}', space=sflag, size = 0x4, scoped, tag = 'scoped memory for nextword_sequence.1']
  #allocation5 [shape = 's32[1]{0:T(128)S(6)}', space=smem, size = 0x200, scoped, tag = 'prefetched SMEM operand 0']
  %s0 = inlined_call_operand.<no memory space> [shape: s32[1], index: 0, kind: input, shape index: {}]
  %s1 = inlined_call_operand.vmem [shape: f32[128,32], index: 1, kind: input, shape index: {}]
  %s2 = inlined_call_operand.vmem [shape: f32[32,128], index: 2, kind: input, shape index: {}]
  %s3 = inlined_call_operand.vmem [shape: f32[32,128], index: 3, kind: input, shape index: {}]
  %s4 = inlined_call_operand.vmem [shape: f32[1,128], index: 4, kind: input, shape index: {}]
  %s5 = inlined_call_operand.vmem [shape: f32[32,128], index: 5, kind: input, shape index: {}]
  %s6 = inlined_call_operand.vmem [shape: f32[1,128], index: 6, kind: input, shape index: {}]
  %s7 = inlined_call_operand.vmem [shape: f32[2,32], index: 7, kind: input, shape index: {}]
  %s8 = inlined_call_operand.hbm [shape: f32[1,128], index: 8, kind: output, shape index: {0}]
  %s9 = inlined_call_operand.vmem [shape: f32[2,32], index: 9, kind: output, shape index: {1}]
  %10 = xla_tuple %s8, %s9
  %s11 = sld [smem:[#allocation0]]
  $region46: #{nextword_sequence.1} parent=0
    _
  %s13 = ssub.s32 1, %s11
  %s14 = scalar_select 0, %s13, %s11
  %15 = sst [smem:[#allocation5]] %s0
  $region1: #{nextword_sequence.1} parent=0
    #allocation6 [shape = 'u8[512]{0}', space=vmem, size = 0x400, scoped, tag = 'output window, operand 0, single buffered']
    #allocation7 [shape = 's32[1]{0}', space=sflag, size = 0x4, scoped, tag = 'scoped memory for nextword_sequence.1']
    %16 = vsyncpa [#allocation7], 0
    // Predicated region
    $region2: #{nextword_sequence.1} parent=1 // pred_check
      _
    $region3: #{nextword_sequence.1} parent=1 // pred_check_branch
      %18 = sbr.rel (0) target = $region5
    $region4: #{nextword_sequence.1} parent=1 // pred_region
      _
    $region5: #{nextword_sequence.1} parent=1 // pred_fallthru
      _
    // Predicated region
    $region6: #{nextword_sequence.1} parent=1 // pred_check
      _
    $region7: #{nextword_sequence.1} parent=1 // pred_check_branch
      %20 = sbr.rel (0) target = $region9
    $region8: #{nextword_sequence.1} parent=1 // pred_region
      _
    $region9: #{nextword_sequence.1} parent=1 // pred_fallthru
      _
    // Predicated region
    $region10: #{nextword_sequence.1} parent=1 // pred_check
      _
    $region11: #{nextword_sequence.1} parent=1 // pred_check_branch
      %22 = sbr.rel (0) target = $region13
    $region12: #{nextword_sequence.1} parent=1 // pred_region
      _
    $region13: #{nextword_sequence.1} parent=1 // pred_fallthru
      _
    // Predicated region
    $region14: #{nextword_sequence.1} parent=1 // pred_check
      _
    $region15: #{nextword_sequence.1} parent=1 // pred_check_branch
      %24 = sbr.rel (0) target = $region17
    $region16: #{nextword_sequence.1} parent=1 // pred_region
      _
    $region17: #{nextword_sequence.1} parent=1 // pred_fallthru
      _
    // Predicated region
    $region18: #{nextword_sequence.1} parent=1 // pred_check
      _
    $region19: #{nextword_sequence.1} parent=1 // pred_check_branch
      %26 = sbr.rel (0) target = $region21
    $region20: #{nextword_sequence.1} parent=1 // pred_region
      _
    $region21: #{nextword_sequence.1} parent=1 // pred_fallthru
      _
    // Predicated region
    $region22: #{nextword_sequence.1} parent=1 // pred_check
      _
    $region23: #{nextword_sequence.1} parent=1 // pred_check_branch
      %28 = sbr.rel (0) target = $region25
    $region24: #{nextword_sequence.1} parent=1 // pred_region
      _
    $region25: #{nextword_sequence.1} parent=1 // pred_fallthru
      _
    // Predicated region
    $region26: #{nextword_sequence.1} parent=1 // pred_check
      _
    $region27: #{nextword_sequence.1} parent=1 // pred_check_branch
      %30 = sbr.rel (0) target = $region29
    $region28: #{nextword_sequence.1} parent=1 // pred_region
      _
    $region29: #{nextword_sequence.1} parent=1 // pred_fallthru
      _
    %s31 = sld [smem:[#allocation5]]
    %s32 = scalar_lea.vmem %s1, %s31
    %v33 = vld [vmem:[%s32] sm:$0x1]
    %vm34 = vcmask 253952
    %35 = vst.msk [vmem:[#allocation2] sm:$0x1] %vm34, %v33
    %v36 = vld [vmem:[#allocation2] sm:$0x1]
    %v37 = vld [vmem:[%s2] sm:$0xff]
    %v38 = vld [vmem:[%s2 + $0x8] sm:$0xff]
    %v39 = vld [vmem:[%s2 + $0x10] sm:$0xff]
    %v40 = vld [vmem:[%s2 + $0x18] sm:$0xff]
    %v41 = vld [vmem:[%s4] sm:$0x1]
    %vm42 = vcmask 261120
    %v44 = vsel %vm42, %v36, 0
    %46 = vmatprep.subr.mxu0 0.0
    %47 = vmatpush1.msra.mxu0 %v37
    %48 = vmatprep.subr.mxu0 0.0
    %49 = vmatpush1.msra.mxu0 %v38
    %50 = vmatprep.subr.mxu0 0.0
    %51 = vmatpush1.msra.mxu0 %v39
    %52 = vmatprep.subr.mxu0 0.0
    %53 = vmatpush1.msra.mxu0 %v40
    %54 = vmatprep.subr.mxu0 0.0
    %55 = vmatpush1.msra.mxu0 0.0
    %56 = vmatprep.subr.mxu0 0.0
    %57 = vmatpush1.msra.mxu0 0.0
    %58 = vmatprep.subr.mxu0 0.0
    %59 = vmatpush1.msra.mxu0 0.0
    %60 = vmatprep.subr.mxu0 0.0
    %61 = vmatpush1.msra.mxu0 0.0
    %62 = vmatprep.subr.mxu0 0.0
    %63 = vmatpush1.msra.mxu0 0.0
    %64 = vmatprep.subr.mxu0 0.0
    %65 = vmatpush1.msra.mxu0 0.0
    %66 = vmatprep.subr.mxu0 0.0
    %67 = vmatpush1.msra.mxu0 0.0
    %68 = vmatprep.subr.mxu0 0.0
    %69 = vmatpush1.msra.mxu0 0.0
    %70 = vmatprep.subr.mxu0 0.0
    %71 = vmatpush1.msra.mxu0 0.0
    %72 = vmatprep.subr.mxu0 0.0
    %73 = vmatpush1.msra.mxu0 0.0
    %74 = vmatprep.subr.mxu0 0.0
    %75 = vmatpush1.msra.mxu0 0.0
    %76 = vmatprep.subr.mxu0 0.0
    %77 = vmatpush1.msra.mxu0 0.0
    %78 = vmatprep.subr.mxu0 0.0
    %79 = vmatpush1.msra.mxu0 0.0
    %80 = vmatprep.subr.mxu0 0.0
    %81 = vmatpush1.msra.mxu0 0.0
    %82 = vmatprep.subr.mxu0 0.0
    %83 = vmatpush1.msra.mxu0 0.0
    %84 = vmatprep.subr.mxu0 0.0
    %85 = vmatpush1.msra.mxu0 0.0
    %86 = vmatprep.subr.mxu0 0.0
    %87 = vmatpush1.msra.mxu0 0.0
    %88 = vmatprep.subr.mxu0 0.0
    %89 = vmatpush1.msra.mxu0 0.0
    %90 = vmatprep.subr.mxu0 0.0
    %91 = vmatpush1.msra.mxu0 0.0
    %92 = vmatprep.subr.mxu0 0.0
    %93 = vmatpush1.msra.mxu0 0.0
    %94 = vmatprep.subr.mxu0 0.0
    %95 = vmatpush1.msra.mxu0 0.0
    %96 = vmatprep.subr.mxu0 0.0
    %97 = vmatpush1.msra.mxu0 0.0
    %98 = vmatprep.subr.mxu0 0.0
    %99 = vmatpush1.msra.mxu0 0.0
    %100 = vmatprep.subr.mxu0 0.0
    %101 = vmatpush1.msra.mxu0 0.0
    %102 = vmatprep.subr.mxu0 0.0
    %103 = vmatpush1.msra.mxu0 0.0
    %104 = vmatprep.subr.mxu0 0.0
    %105 = vmatpush1.msra.mxu0 0.0
    %106 = vmatprep.subr.mxu0 0.0
    %107 = vmatpush1.msra.mxu0 0.0
    %108 = vmatprep.subr.mxu0 0.0
    %109 = vmatpush1.msra.mxu0 0.0
    %110 = vmatprep.mubr.f32.mxu0 0.0
    %111 = vmatmul.mubr.f32.gmra.mrb[0].mxu0 %v44
    %v112 = vpop.f32.mrb[0].mxu0
    %v113 = vadd.f32 %v41, %v112
    %v114 = vpop.f32.mrb[0].mxu0
    %115 = vdwg.mxu0
    %v116 = vld [vmem:[%s7] sm:$0x1]
    %v117 = vld [vmem:[%s7 + $0x1] sm:$0x1]
    %v118 = vld [vmem:[%s3] sm:$0xff]
    %v119 = vld [vmem:[%s3 + $0x8] sm:$0xff]
    %v120 = vld [vmem:[%s3 + $0x10] sm:$0xff]
    %v121 = vld [vmem:[%s3 + $0x18] sm:$0xff]
    %v123 = vsel %vm42, %v116, 0
    %125 = vmatprep.subr.mxu0 0.0
    %126 = vmatpush1.msra.mxu0 %v118
    %127 = vmatprep.subr.mxu0 0.0
    %128 = vmatpush1.msra.mxu0 %v119
    %129 = vmatprep.subr.mxu0 0.0
    %130 = vmatpush1.msra.mxu0 %v120
    %131 = vmatprep.subr.mxu0 0.0
    %132 = vmatpush1.msra.mxu0 %v121
    %133 = vmatprep.subr.mxu0 0.0
    %134 = vmatpush1.msra.mxu0 0.0
    %135 = vmatprep.subr.mxu0 0.0
    %136 = vmatpush1.msra.mxu0 0.0
    %137 = vmatprep.subr.mxu0 0.0
    %138 = vmatpush1.msra.mxu0 0.0
    %139 = vmatprep.subr.mxu0 0.0
    %140 = vmatpush1.msra.mxu0 0.0
    %141 = vmatprep.subr.mxu0 0.0
    %142 = vmatpush1.msra.mxu0 0.0
    %143 = vmatprep.subr.mxu0 0.0
    %144 = vmatpush1.msra.mxu0 0.0
    %145 = vmatprep.subr.mxu0 0.0
    %146 = vmatpush1.msra.mxu0 0.0
    %147 = vmatprep.subr.mxu0 0.0
    %148 = vmatpush1.msra.mxu0 0.0
    %149 = vmatprep.subr.mxu0 0.0
    %150 = vmatpush1.msra.mxu0 0.0
    %151 = vmatprep.subr.mxu0 0.0
    %152 = vmatpush1.msra.mxu0 0.0
    %153 = vmatprep.subr.mxu0 0.0
    %154 = vmatpush1.msra.mxu0 0.0
    %155 = vmatprep.subr.mxu0 0.0
    %156 = vmatpush1.msra.mxu0 0.0
    %157 = vmatprep.subr.mxu0 0.0
    %158 = vmatpush1.msra.mxu0 0.0
    %159 = vmatprep.subr.mxu0 0.0
    %160 = vmatpush1.msra.mxu0 0.0
    %161 = vmatprep.subr.mxu0 0.0
    %162 = vmatpush1.msra.mxu0 0.0
    %163 = vmatprep.subr.mxu0 0.0
    %164 = vmatpush1.msra.mxu0 0.0
    %165 = vmatprep.subr.mxu0 0.0
    %166 = vmatpush1.msra.mxu0 0.0
    %167 = vmatprep.subr.mxu0 0.0
    %168 = vmatpush1.msra.mxu0 0.0
    %169 = vmatprep.subr.mxu0 0.0
    %170 = vmatpush1.msra.mxu0 0.0
    %171 = vmatprep.subr.mxu0 0.0
    %172 = vmatpush1.msra.mxu0 0.0
    %173 = vmatprep.subr.mxu0 0.0
    %174 = vmatpush1.msra.mxu0 0.0
    %175 = vmatprep.subr.mxu0 0.0
    %176 = vmatpush1.msra.mxu0 0.0
    %177 = vmatprep.subr.mxu0 0.0
    %178 = vmatpush1.msra.mxu0 0.0
    %179 = vmatprep.subr.mxu0 0.0
    %180 = vmatpush1.msra.mxu0 0.0
    %181 = vmatprep.subr.mxu0 0.0
    %182 = vmatpush1.msra.mxu0 0.0
    %183 = vmatprep.subr.mxu0 0.0
    %184 = vmatpush1.msra.mxu0 0.0
    %185 = vmatprep.subr.mxu0 0.0
    %186 = vmatpush1.msra.mxu0 0.0
    %187 = vmatprep.subr.mxu0 0.0
    %188 = vmatpush1.msra.mxu0 0.0
    %189 = vmatprep.mubr.f32.mxu0 0.0
    %190 = vmatmul.mubr.f32.gmra.mrb[0].mxu0 %v123
    %v191 = vpop.f32.mrb[0].mxu0
    %v192 = vadd.f32 0.0, %v191
    %v193 = vpop.f32.mrb[0].mxu0
    %194 = vdwg.mxu0
    %v195 = vadd.f32 %v113, %v192
    %v196 = vxor.u32 %v195, 2147483648
    %v197 = vmul.f32 %v196, 1.442695
    %v198 = vpow.pop %v197
    %v199 = vadd.f32 %v198, 1.0
    %v200 = vrcp.pop %v199
    %v201 = vmul.f32 1.0, %v200
    %v202 = vtanh.pop %v195
    %204 = vrot.lane.b32.xlu0 %v117, 32
    %v205 = vpop.permute.xlu0 %204
    %v207 = vmul.f32 %v201, %v205
    %209 = vrot.lane.b32.xlu0 %v202, 64
    %v210 = vpop.permute.xlu0 %209
    %v212 = vmul.f32 %v201, %v210
    %214 = vrot.lane.b32.xlu0 %v212, 32
    %v215 = vpop.permute.xlu0 %214
    %v217 = vadd.f32 %v207, %v215
    %v218 = vtanh.pop %v217
    %220 = vrot.lane.b32.xlu0 %v218, 64
    %v221 = vpop.permute.xlu0 %220
    %v223 = vmul.f32 %v201, %v221
    %225 = vrot.lane.b32.xlu0 %v223, 32
    %v226 = vpop.permute.xlu0 %225
    %228 = vst.msk [vmem:[#allocation3] sm:$0x1] %vm34, %v226
    %v229 = vld [vmem:[#allocation3] sm:$0x1]
    %v230 = vld [vmem:[%s5] sm:$0xff]
    %v231 = vld [vmem:[%s5 + $0x8] sm:$0xff]
    %v232 = vld [vmem:[%s5 + $0x10] sm:$0xff]
    %v233 = vld [vmem:[%s5 + $0x18] sm:$0xff]
    %v234 = vld [vmem:[%s6] sm:$0x1]
    %v236 = vsel %vm42, %v229, 0
    %238 = vmatprep.subr.mxu0 0.0
    %239 = vmatpush1.msra.mxu0 %v230
    %240 = vmatprep.subr.mxu0 0.0
    %241 = vmatpush1.msra.mxu0 %v231
    %242 = vmatprep.subr.mxu0 0.0
    %243 = vmatpush1.msra.mxu0 %v232
    %244 = vmatprep.subr.mxu0 0.0
    %245 = vmatpush1.msra.mxu0 %v233
    %246 = vmatprep.subr.mxu0 0.0
    %247 = vmatpush1.msra.mxu0 0.0
    %248 = vmatprep.subr.mxu0 0.0
    %249 = vmatpush1.msra.mxu0 0.0
    %250 = vmatprep.subr.mxu0 0.0
    %251 = vmatpush1.msra.mxu0 0.0
    %252 = vmatprep.subr.mxu0 0.0
    %253 = vmatpush1.msra.mxu0 0.0
    %254 = vmatprep.subr.mxu0 0.0
    %255 = vmatpush1.msra.mxu0 0.0
    %256 = vmatprep.subr.mxu0 0.0
    %257 = vmatpush1.msra.mxu0 0.0
    %258 = vmatprep.subr.mxu0 0.0
    %259 = vmatpush1.msra.mxu0 0.0
    %260 = vmatprep.subr.mxu0 0.0
    %261 = vmatpush1.msra.mxu0 0.0
    %262 = vmatprep.subr.mxu0 0.0
    %263 = vmatpush1.msra.mxu0 0.0
    %264 = vmatprep.subr.mxu0 0.0
    %265 = vmatpush1.msra.mxu0 0.0
    %266 = vmatprep.subr.mxu0 0.0
    %267 = vmatpush1.msra.mxu0 0.0
    %268 = vmatprep.subr.mxu0 0.0
    %269 = vmatpush1.msra.mxu0 0.0
    %270 = vmatprep.subr.mxu0 0.0
    %271 = vmatpush1.msra.mxu0 0.0
    %272 = vmatprep.subr.mxu0 0.0
    %273 = vmatpush1.msra.mxu0 0.0
    %274 = vmatprep.subr.mxu0 0.0
    %275 = vmatpush1.msra.mxu0 0.0
    %276 = vmatprep.subr.mxu0 0.0
    %277 = vmatpush1.msra.mxu0 0.0
    %278 = vmatprep.subr.mxu0 0.0
    %279 = vmatpush1.msra.mxu0 0.0
    %280 = vmatprep.subr.mxu0 0.0
    %281 = vmatpush1.msra.mxu0 0.0
    %282 = vmatprep.subr.mxu0 0.0
    %283 = vmatpush1.msra.mxu0 0.0
    %284 = vmatprep.subr.mxu0 0.0
    %285 = vmatpush1.msra.mxu0 0.0
    %286 = vmatprep.subr.mxu0 0.0
    %287 = vmatpush1.msra.mxu0 0.0
    %288 = vmatprep.subr.mxu0 0.0
    %289 = vmatpush1.msra.mxu0 0.0
    %290 = vmatprep.subr.mxu0 0.0
    %291 = vmatpush1.msra.mxu0 0.0
    %292 = vmatprep.subr.mxu0 0.0
    %293 = vmatpush1.msra.mxu0 0.0
    %294 = vmatprep.subr.mxu0 0.0
    %295 = vmatpush1.msra.mxu0 0.0
    %296 = vmatprep.subr.mxu0 0.0
    %297 = vmatpush1.msra.mxu0 0.0
    %298 = vmatprep.subr.mxu0 0.0
    %299 = vmatpush1.msra.mxu0 0.0
    %300 = vmatprep.subr.mxu0 0.0
    %301 = vmatpush1.msra.mxu0 0.0
    %302 = vmatprep.mubr.f32.mxu0 0.0
    %303 = vmatmul.mubr.f32.gmra.mrb[0].mxu0 %v236
    %v304 = vpop.f32.mrb[0].mxu0
    %v305 = vadd.f32 %v234, %v304
    %v306 = vpop.f32.mrb[0].mxu0
    %307 = vdwg.mxu0
    %v308 = vxor.u32 %v305, 2147483648
    %v309 = vmul.f32 %v308, 1.442695
    %v310 = vpow.pop %v309
    %v311 = vadd.f32 %v310, 1.0
    %v312 = vrcp.pop %v311
    %v313 = vmul.f32 1.0, %v312
    %314 = vst [vmem:[#allocation6] sm:$0x1] %v313
    %315 = vst.msk [vmem:[%s9] sm:$0x1] %vm34, %v226
    %317 = vrot.lane.b32.xlu0 %v217, 96
    %v318 = vpop.permute.xlu0 %317
    %320 = vst.msk [vmem:[%s9 + $0x1] sm:$0x1] %vm34, %v318
    // Predicated region
    $region30: #{nextword_sequence.1} parent=1 // pred_check
      _
    $region31: #{nextword_sequence.1} parent=1 // pred_check_branch
      %322 = sbr.rel (0) target = $region33
    $region32: #{nextword_sequence.1} parent=1 // pred_region
      %s324 = ssub.s32 16, 16
      %325 = vsyncadd [#allocation7], %s324
      %s327 = sshll.u32 [#allocation6], 4
      %s328 = int_to_ptr.vmem [resolvable:$true] %s327
      %330 = dma.vmem_to_hbm [thread:$0]  %s328, 16, %s8, [#allocation7]
    $region33: #{nextword_sequence.1} parent=1 // pred_fallthru
      _
    // Predicated region
    $region34: #{nextword_sequence.1} parent=1 // pred_check
      _
    $region35: #{nextword_sequence.1} parent=1 // pred_check_branch
      %332 = sbr.rel (0) target = $region37
    $region36: #{nextword_sequence.1} parent=1 // pred_region
      _
    $region37: #{nextword_sequence.1} parent=1 // pred_fallthru
      _
    // Predicated region
    $region38: #{nextword_sequence.1} parent=1 // pred_check
      _
    $region39: #{nextword_sequence.1} parent=1 // pred_check_branch
      %334 = sbr.rel (0) target = $region41
    $region40: #{nextword_sequence.1} parent=1 // pred_region
      %335 = dma.done [#allocation7], 16
    $region41: #{nextword_sequence.1} parent=1 // pred_fallthru
      _
    // Predicated region
    $region42: #{nextword_sequence.1} parent=1 // pred_check
      _
    $region43: #{nextword_sequence.1} parent=1 // pred_check_branch
      %337 = sbr.rel (0) target = $region45
    $region44: #{nextword_sequence.1} parent=1 // pred_region
      _
    $region45: #{nextword_sequence.1} parent=1 // pred_fallthru
      _
    %338 = vsyncpa [#allocation7], 1

</llo_original>
